<compile_context>
chip_gen: v6e
topology: v6e:2x2x1
jax: 0.10.0
libtpu: 0.0.40
codegen_flags: <defaults>
</compile_context>

<pallas_src>
import functools

import jax
import jax.numpy as jnp
from jax import lax
from jax.experimental import pallas as pl
from jax.experimental.pallas import tpu as pltpu


def _round_up(x: int, m: int) -> int:
    return (x + m - 1) // m * m


def _cdiv(a: int, b: int) -> int:
    return (a + b - 1) // b


def _baseline_reg_loss_kernel(pred_ref, anch_ref, out_ref, *,
                              inv_n: float, batch: int, ncoord: int, feat: int,
                              tile_rows: int, chunk: int, needs_mask: bool):
    # pred_ref: (tile_rows, ncoord)  VMEM (raw predictions rows of this tile)
    # anch_ref: (tile_rows, feat)    VMEM, lane-dense, feat = N*ncoord
    # out_ref:  (8, ncoord)          VMEM f32 per-tile partial sums (disjoint per step)
    i = pl.program_id(0)
    lanes = 128

    # Static selector generated on the VPU (no HBM buffer / DMA):
    #   sel[r, c] = 1 if (r % ncoord) == c else 0 ; only columns 0..ncoord-1 hit.
    r_ids = lax.broadcasted_iota(jnp.int32, (feat, lanes), 0)
    c_ids = lax.broadcasted_iota(jnp.int32, (feat, lanes), 1)
    sel = jnp.where(r_ids % ncoord == c_ids, 1.0, 0.0).astype(anch_ref.dtype)

    num_chunks = tile_rows // chunk

    def body(c, acc):
        r0 = pl.multiple_of(c * chunk, 8)
        anch = anch_ref[pl.ds(r0, chunk), :]                       # (chunk, feat)
        pred = pred_ref[pl.ds(r0, chunk), :]                       # (chunk, ncoord)
        # Per-coordinate sums over the N anchors on the MXU; f32 accumulation,
        # anchors stay in their native dtype (bf16 anchors are never bulk-upcast).
        coord_sums = jnp.dot(anch, sel, preferred_element_type=jnp.float32)
        anch_mean = coord_sums[:, :ncoord] * inv_n                 # (chunk, ncoord)
        diff = pred.astype(jnp.float32) - anch_mean
        if needs_mask:
            rows = (i * tile_rows + c * chunk
                    + lax.broadcasted_iota(jnp.int32, (chunk, ncoord), 0))
            diff = jnp.where(rows < batch, diff, 0.0)              # zero ragged rows
        d2 = diff * diff
        # VPU-only reduce of sublane-groups into a single (8, ncoord) tile; the
        # full cross-lane/sublane reduce is deferred to the wrapper-side sum.
        return acc + d2.reshape(chunk // 8, 8, ncoord).sum(axis=0)

    acc0 = jnp.zeros((8, ncoord), jnp.float32)
    out_ref[...] = lax.fori_loop(0, num_chunks, body, acc0)


def baseline_reg_loss(predictions: jax.Array, anchors: jax.Array,
                      *, tile_rows: int | None = None) -> jax.Array:
    """predictions: (B, 3); anchors: anything reshapeable to (B, -1, 3)."""
    B, C = predictions.shape
    anchors2d = anchors.reshape(B, -1)          # contiguous reshape: no HBM copy
    F = anchors2d.shape[1]
    assert F % C == 0, "anchors not reshapeable to (B, -1, 3)"
    N = F // C

    a_item = jnp.dtype(anchors2d.dtype).itemsize
    p_item = jnp.dtype(predictions.dtype).itemsize
    LANES = 128
    CHUNK = 512   # inner-loop row chunk: bounds unrolled vector code & f32 temps

    # Tiny-batch edge case: pad a few zero rows (contribute exactly 0 to the sum)
    # so the row-block can satisfy the sublane multiple-of-8 rule. Negligible cost.
    B_rows = B
    pred_in = predictions
    anch_in = anchors2d
    if B < 8:
        B_rows = 8
        pred_in = jnp.zeros((8, C), predictions.dtype).at[:B].set(predictions)
        anch_in = jnp.zeros((8, F), anchors2d.dtype).at[:B].set(anchors2d)

    # Batch tiling: one anchors(+preds) block ~13 MiB; double-buffered blocks plus
    # the in-kernel (F,128) selector and per-chunk temps stay inside the 48 MiB
    # scoped-VMEM request on every generation (v7x: 64 MiB/TC physical; v5e/v6e: 128 MiB).
    if tile_rows is None:
        block_budget = 13 * 1024 * 1024
        tile_rows = block_budget // (F * a_item + C * p_item)
    tile_rows = max(8, min(int(tile_rows), B_rows) // 8 * 8)   # never exceed the array
    if tile_rows >= CHUNK:
        chunk = CHUNK
        tile_rows = tile_rows // CHUNK * CHUNK
    else:
        chunk = tile_rows
    grid_steps = _cdiv(B_rows, tile_rows)
    needs_mask = (B_rows % tile_rows) != 0
    # TODO(synk): for extremely large F (F*128 selector + one row-block no longer fit
    # VMEM) add an inner "arbitrary" F grid axis with a per-row coord-sum accumulator.
    # TODO(synk): on v5e with f32 anchors, optionally cast the anchors chunk to bf16 for
    # the selector matmul (keeps HBM-bound regime) when tolerance allows.

    kernel = functools.partial(
        _baseline_reg_loss_kernel,
        inv_n=1.0 / N, batch=B, ncoord=C, feat=F,
        tile_rows=tile_rows, chunk=chunk, needs_mask=needs_mask)

    partials = pl.pallas_call(
        kernel,
        out_shape=jax.ShapeDtypeStruct((grid_steps * 8, C), jnp.float32),
        grid_spec=pltpu.PrefetchScalarGridSpec(
            num_scalar_prefetch=0,
            grid=(grid_steps,),
            in_specs=[
                pl.BlockSpec((tile_rows, C), lambda i: (i, 0)),   # predictions, unpadded
                pl.BlockSpec((tile_rows, F), lambda i: (i, 0)),   # anchors, lane-dense
            ],
            out_specs=pl.BlockSpec((8, C), lambda i: (i, 0)),     # per-tile partial sums
        ),
        compiler_params=pltpu.CompilerParams(
            # No cross-step state -> batch axis is parallel (uses both TCs on v7x).
            dimension_semantics=("parallel",),
            vmem_limit_bytes=48 * 1024 * 1024,
        ),
        cost_estimate=pl.CostEstimate(
            flops=2 * grid_steps * tile_rows * F * LANES,          # real MXU work
            transcendentals=0,
            bytes_accessed=B_rows * F * a_item + B_rows * C * p_item
                           + grid_steps * 8 * C * 4,
        ),
    )(pred_in, anch_in)

    # nn.MSELoss() default reduction='mean' -> divide by (B * 3).
    return jnp.sum(partials) * (1.0 / (B * C))


if __name__ == "__main__":
    key = jax.random.PRNGKey(0)
    k_pred, k_anch, k_pred2, k_anch2 = jax.random.split(key, 4)

    # Small test matching the module: batch=2, 8 anchors per example, 3 coords.
    B, N = 2, 8
    predictions = jax.random.normal(k_pred, (B, 3), dtype=jnp.float32)
    anchors = jax.random.normal(k_anch, (B, N * 3), dtype=jnp.float32)

    loss = jax.block_until_ready(baseline_reg_loss(predictions, anchors))
    ref = jnp.mean((predictions - anchors.reshape(B, -1, 3).mean(axis=1)) ** 2)
    assert jnp.allclose(loss, ref, rtol=1e-5, atol=1e-6), (loss, ref)

    # Multi-tile grid with a ragged (masked) last tile; anchors given as (B, N, 3).
    B2, N2 = 300, 16
    predictions2 = jax.random.normal(k_pred2, (B2, 3), dtype=jnp.float32)
    anchors2 = jax.random.normal(k_anch2, (B2, N2, 3), dtype=jnp.float32)
    loss2 = jax.block_until_ready(
        baseline_reg_loss(predictions2, anchors2, tile_rows=128))
    ref2 = jnp.mean((predictions2 - anchors2.reshape(B2, -1, 3).mean(axis=1)) ** 2)
    assert jnp.allclose(loss2, ref2, rtol=1e-5, atol=1e-6), (loss2, ref2)

    # Default (auto) tile-size path on the same data.
    loss3 = jax.block_until_ready(baseline_reg_loss(predictions2, anchors2))
    assert jnp.allclose(loss3, ref2, rtol=1e-5, atol=1e-6), (loss3, ref2)

    print("KERNEL_OK")
</pallas_src>

<mosaic_0001>
module attributes {stable_mosaic.version = 11 : i64} {
  func.func @_baseline_reg_loss_kernel(%arg0: i32, %arg1: memref<8x3xf32, #tpu.memory_space<vmem>>, %arg2: memref<8x24xf32, #tpu.memory_space<vmem>>, %arg3: memref<8x3xf32, #tpu.memory_space<vmem>>) attributes {dimension_semantics = [#tpu.dimension_semantics<parallel>], iteration_bounds = array<i64: 1>, scalar_prefetch = 0 : i64, scratch_operands = 0 : i64, tpu.core_type = #tpu.core_type<tc>, window_params = [{transform_indices = @transform_0, window_bounds = array<i64: 8, 3>}, {transform_indices = @transform_1, window_bounds = array<i64: 8, 24>}, {transform_indices = @transform_2, window_bounds = array<i64: 8, 3>}]} {
    %0 = tpu.iota {dimensions = array<i32: 0>} : vector<24x128xi32>
    %1 = tpu.iota {dimensions = array<i32: 1>} : vector<24x128xi32>
    %c3_i32 = arith.constant 3 : i32
    %c0_i32 = arith.constant 0 : i32
    %2 = arith.cmpi eq, %c3_i32, %c0_i32 : i32
    %c1_i32 = arith.constant 1 : i32
    %3 = arith.select %2, %c1_i32, %c3_i32 : i32
    %4 = vector.broadcast %3 : i32 to vector<24x128xi32>
    %5 = arith.remsi %0, %4 : vector<24x128xi32>
    %c0_i32_0 = arith.constant 0 : i32
    %6 = vector.broadcast %c0_i32_0 : i32 to vector<24x128xi32>
    %7 = arith.cmpi ne, %5, %6 : vector<24x128xi32>
    %c0_i32_1 = arith.constant 0 : i32
    %8 = vector.broadcast %c0_i32_1 : i32 to vector<24x128xi32>
    %9 = arith.cmpi slt, %5, %8 : vector<24x128xi32>
    %c0_i32_2 = arith.constant 0 : i32
    %10 = arith.cmpi slt, %3, %c0_i32_2 : i32
    %11 = vector.broadcast %10 : i1 to vector<24x128xi1>
    %12 = vector.broadcast %11 : vector<24x128xi1> to vector<24x128xi1>
    %13 = arith.xori %9, %12 : vector<24x128xi1>
    %14 = arith.andi %13, %7 : vector<24x128xi1>
    %15 = vector.broadcast %3 : i32 to vector<24x128xi32>
    %16 = arith.addi %5, %15 : vector<24x128xi32>
    %17 = arith.select %14, %16, %5 : vector<24x128xi1>, vector<24x128xi32>
    %18 = arith.cmpi eq, %17, %1 : vector<24x128xi32>
    %cst = arith.constant 1.000000e+00 : f32
    %cst_3 = arith.constant 0.000000e+00 : f32
    %19 = vector.broadcast %cst : f32 to vector<24x128xf32>
    %20 = vector.broadcast %cst_3 : f32 to vector<24x128xf32>
    %21 = arith.select %18, %19, %20 : vector<24x128xi1>, vector<24x128xf32>
    %cst_4 = arith.constant 0.000000e+00 : f32
    %22 = vector.broadcast %cst_4 : f32 to vector<8x3xf32>
    %c0_i32_5 = arith.constant 0 : i32
    %c8_i32 = arith.constant 8 : i32
    %23 = arith.muli %c0_i32_5, %c8_i32 : i32
    %24 = tpu.assume_multiple %23, 8 : i32
    %25 = arith.index_cast %24 : i32 to index
    %c0 = arith.constant 0 : index
    %26 = vector.load %arg2[%25, %c0] : memref<8x24xf32, #tpu.memory_space<vmem>>, vector<8x24xf32>
    %27 = arith.index_cast %24 : i32 to index
    %c0_6 = arith.constant 0 : index
    %28 = vector.load %arg1[%27, %c0_6] : memref<8x3xf32, #tpu.memory_space<vmem>>, vector<8x3xf32>
    %cst_7 = arith.constant dense<0.000000e+00> : vector<8x128xf32>
    %29 = tpu.matmul %26, %21, %cst_7 {dimension_numbers = #tpu.dot_dimension_numbers<[1], [0], [0], [1], [0, 0, 1, 1], [], []>} : vector<8x24xf32>, vector<24x128xf32>, vector<8x128xf32> -> vector<8x128xf32>
    %30 = vector.extract_strided_slice %29 {offsets = [0, 0], sizes = [8, 3], strides = [1, 1]} : vector<8x128xf32> to vector<8x3xf32>
    %cst_8 = arith.constant 1.250000e-01 : f32
    %31 = vector.broadcast %cst_8 : f32 to vector<8x3xf32>
    %32 = arith.mulf %30, %31 : vector<8x3xf32>
    %33 = arith.subf %28, %32 : vector<8x3xf32>
    %34 = arith.mulf %33, %33 : vector<8x3xf32>
    %35 = vector.shape_cast %34 : vector<8x3xf32> to vector<1x8x3xf32>
    %cst_9 = arith.constant dense<0.000000e+00> : vector<8x3xf32>
    %36 = vector.multi_reduction <add>, %35, %cst_9 [0] : vector<1x8x3xf32> to vector<8x3xf32>
    %37 = arith.addf %22, %36 : vector<8x3xf32>
    %c1_i32_10 = arith.constant 1 : i32
    %c0_11 = arith.constant 0 : index
    %c0_12 = arith.constant 0 : index
    %38 = vector.load %arg3[%c0_11, %c0_12] : memref<8x3xf32, #tpu.memory_space<vmem>>, vector<8x3xf32>
    tpu.vector_store %arg3[%c0_11, %c0_12], %37 {strides = array<i32>} : memref<8x3xf32, #tpu.memory_space<vmem>>, vector<8x3xf32>,
    return
  }
  func.func @transform_0(%arg0: i32) -> (i32, i32) {
    %c0_i32 = arith.constant 0 : i32
    %c0_i32_0 = arith.constant 0 : i32
    return %arg0, %c0_i32 : i32, i32
  }
  func.func @transform_1(%arg0: i32) -> (i32, i32) {
    %c0_i32 = arith.constant 0 : i32
    %c0_i32_0 = arith.constant 0 : i32
    return %arg0, %c0_i32 : i32, i32
  }
  func.func @transform_2(%arg0: i32) -> (i32, i32) {
    %c0_i32 = arith.constant 0 : i32
    %c0_i32_0 = arith.constant 0 : i32
    return %arg0, %c0_i32 : i32, i32
  }
}

</mosaic_0001>

<llo_original>
// kernel: tpu_custom_call.1
$region0: #{tpu_custom_call.1}
  #allocation0 [shape = 'u32[]', space=smem, size = 0x4, offset = 0x4, fixed_abs, tag = 'smem constant byte address 0x4 - core index']
  #allocation1 [shape = 'u32[144,128]{1,0:T(1,128)}', space=vmem, size = 0x12000, scoped, tag = 'internal scratch']
  %s0 = inlined_call_operand.vmem [shape: f32[8,3], index: 0, kind: input, shape index: {}]
  %s1 = inlined_call_operand.vmem [shape: f32[8,24], index: 1, kind: input, shape index: {}]
  %s2 = inlined_call_operand.vmem [shape: f32[8,3], index: 2, kind: output, shape index: {}]
  %s3 = sld [smem:[#allocation0]]
  $region18: #{tpu_custom_call.1} parent=0
    _
  %s5 = ssub.s32 1, %s3
  %s6 = scalar_select 0, %s5, %s3
  // Predicated region
  $region2: #{tpu_custom_call.1} parent=0 // pred_check
    _
  $region3: #{tpu_custom_call.1} parent=0 // pred_check_branch
    %8 = sbr.rel (0) target = $region5
  $region4: #{tpu_custom_call.1} parent=0 // pred_region
    _
  $region5: #{tpu_custom_call.1} parent=0 // pred_fallthru
    _
  // Predicated region
  $region6: #{tpu_custom_call.1} parent=0 // pred_check
    _
  $region7: #{tpu_custom_call.1} parent=0 // pred_check_branch
    %10 = sbr.rel (0) target = $region9
  $region8: #{tpu_custom_call.1} parent=0 // pred_region
    _
  $region9: #{tpu_custom_call.1} parent=0 // pred_fallthru
    _
  %v11 = vlaneseq
  %v12 = vshrl.u32 %v11, 7
  %v13 = vadd.s32 %v12, 8
  %v14 = vadd.s32 %v12, 16
  %v15 = vlaneseq
  %v16 = vand.u32 %v15, 127
  %vm17 = vcmp.lt.s32.totalorder %v12, 0
  %v18 = vsub.s32 0, %v12
  %v19 = vsel %vm17, %v18, %v12
  %v20 = vmul.u32.u64.compose %v19, 2863311531
  %v21 = vextract.low.u32 %v20
  %v22 = vextract.high.u32 %v20
  %v23 = vshrl.u32 %v22, 1
  %v24 = vmul.u32 %v23, 3
  %v25 = vsub.s32 %v19, %v24
  %v26 = vsub.s32 0, %v25
  %v27 = vsel %vm17, %v26, %v25
  %vm28 = vcmp.lt.s32.totalorder %v13, 0
  %v29 = vsub.s32 0, %v13
  %v30 = vsel %vm28, %v29, %v13
  %v31 = vmul.u32.u64.compose %v30, 2863311531
  %v32 = vextract.low.u32 %v31
  %v33 = vextract.high.u32 %v31
  %v34 = vshrl.u32 %v33, 1
  %v35 = vmul.u32 %v34, 3
  %v36 = vsub.s32 %v30, %v35
  %v37 = vsub.s32 0, %v36
  %v38 = vsel %vm28, %v37, %v36
  %vm39 = vcmp.lt.s32.totalorder %v14, 0
  %v40 = vsub.s32 0, %v14
  %v41 = vsel %vm39, %v40, %v14
  %v42 = vmul.u32.u64.compose %v41, 2863311531
  %v43 = vextract.low.u32 %v42
  %v44 = vextract.high.u32 %v42
  %v45 = vshrl.u32 %v44, 1
  %v46 = vmul.u32 %v45, 3
  %v47 = vsub.s32 %v41, %v46
  %v48 = vsub.s32 0, %v47
  %v49 = vsel %vm39, %v48, %v47
  %vm50 = vcmp.ne.s32.totalorder %v27, 0
  %vm51 = vcmp.ne.s32.totalorder %v38, 0
  %vm52 = vcmp.ne.s32.totalorder %v49, 0
  %vm53 = vcmp.lt.s32.totalorder %v27, 0
  %vm54 = vcmp.lt.s32.totalorder %v38, 0
  %vm55 = vcmp.lt.s32.totalorder %v49, 0
  %vm56 = vmand %vm53, %vm50
  %vm57 = vmand %vm54, %vm51
  %vm58 = vmand %vm55, %vm52
  %v59 = vadd.s32 %v27, 3
  %v60 = vadd.s32 %v38, 3
  %v61 = vadd.s32 %v49, 3
  %v62 = vsel %vm56, %v59, %v27
  %v63 = vsel %vm57, %v60, %v38
  %v64 = vsel %vm58, %v61, %v49
  %vm65 = vcmp.eq.s32.totalorder %v62, %v16
  %vm66 = vcmp.eq.s32.totalorder %v63, %v16
  %vm67 = vcmp.eq.s32.totalorder %v64, %v16
  %v68 = vsel %vm65, 1.0, 0.0
  %v69 = vsel %vm66, 1.0, 0.0
  %v70 = vsel %vm67, 1.0, 0.0
  %v71 = vld [vmem:[%s1] sm:$0xff]
  %v72 = vld [vmem:[%s0] sm:$0xff]
  %vm73 = vcmask 195584
  %v75 = vsel %vm73, %v71, 0
  %77 = vmatprep.subr.mxu0 0.0
  %78 = vmatpush1.msra.mxu0 0.0
  %79 = vmatprep.subr.mxu0 0.0
  %80 = vmatpush1.msra.mxu0 0.0
  %81 = vmatprep.subr.mxu0 0.0
  %82 = vmatpush1.msra.mxu0 0.0
  %83 = vmatprep.subr.mxu0 0.0
  %84 = vmatpush1.msra.mxu0 0.0
  %85 = vmatprep.subr.mxu0 0.0
  %86 = vmatpush1.msra.mxu0 0.0
  %87 = vmatprep.subr.mxu0 0.0
  %88 = vmatpush1.msra.mxu0 0.0
  %89 = vmatprep.subr.mxu0 0.0
  %90 = vmatpush1.msra.mxu0 0.0
  %91 = vmatprep.subr.mxu0 0.0
  %92 = vmatpush1.msra.mxu0 0.0
  %93 = vmatprep.subr.mxu0 0.0
  %94 = vmatpush1.msra.mxu0 0.0
  %95 = vmatprep.subr.mxu0 0.0
  %96 = vmatpush1.msra.mxu0 0.0
  %97 = vmatprep.subr.mxu0 0.0
  %98 = vmatpush1.msra.mxu0 0.0
  %99 = vmatprep.subr.mxu0 0.0
  %100 = vmatpush1.msra.mxu0 0.0
  %101 = vmatprep.subr.mxu0 0.0
  %102 = vmatpush1.msra.mxu0 0.0
  %103 = vmatprep.subr.mxu0 0.0
  %104 = vmatpush1.msra.mxu0 %v70
  %105 = vmatprep.subr.mxu0 0.0
  %106 = vmatpush1.msra.mxu0 %v69
  %107 = vmatprep.subr.mxu0 0.0
  %108 = vmatpush1.msra.mxu0 %v68
  %109 = vmatprep.subr.mxu0 0.0
  %110 = vmatpush2.msra.mxu0 0.0
  %111 = vmatprep.subr.mxu0 0.0
  %112 = vmatpush2.msra.mxu0 0.0
  %113 = vmatprep.subr.mxu0 0.0
  %114 = vmatpush2.msra.mxu0 0.0
  %115 = vmatprep.subr.mxu0 0.0
  %116 = vmatpush2.msra.mxu0 0.0
  %117 = vmatprep.subr.mxu0 0.0
  %118 = vmatpush2.msra.mxu0 0.0
  %119 = vmatprep.subr.mxu0 0.0
  %120 = vmatpush2.msra.mxu0 0.0
  %121 = vmatprep.subr.mxu0 0.0
  %122 = vmatpush2.msra.mxu0 0.0
  %123 = vmatprep.subr.mxu0 0.0
  %124 = vmatpush2.msra.mxu0 0.0
  %125 = vmatprep.subr.mxu0 0.0
  %126 = vmatpush2.msra.mxu0 0.0
  %127 = vmatprep.subr.mxu0 0.0
  %128 = vmatpush2.msra.mxu0 0.0
  %129 = vmatprep.subr.mxu0 0.0
  %130 = vmatpush2.msra.mxu0 0.0
  %131 = vmatprep.subr.mxu0 0.0
  %132 = vmatpush2.msra.mxu0 0.0
  %133 = vmatprep.subr.mxu0 0.0
  %134 = vmatpush2.msra.mxu0 0.0
  %135 = vmatprep.subr.mxu0 0.0
  %136 = vmatpush2.msra.mxu0 0.0
  %137 = vmatprep.subr.mxu0 0.0
  %138 = vmatpush2.msra.mxu0 0.0
  %139 = vmatprep.subr.mxu0 0.0
  %140 = vmatpush2.msra.mxu0 0.0
  %141 = vmatprep.mubr.f32.mxu0 0.0
  %142 = vmatmul.mubr.f32.gmra.mxu0 %v75
  %v143 = vpop.f32.mrf.mxu0
  %v144 = vadd.f32 0.0, %v143
  %v145 = vpop.f32.mrf.mxu0
  %146 = vdwg.mxu0
  %v147 = vmul.f32 %v144, 0.125
  %v148 = vsub.f32 %v72, %v147
  %v149 = vmul.f32 %v148, %v148
  %v150 = vadd.f32 %v149, 0.0
  %v151 = vadd.f32 %v150, 0.0
  %vm152 = vcmask 23552
  %153 = vst.msk [vmem:[%s2] sm:$0xff] %vm152, %v151
  // Predicated region
  $region10: #{tpu_custom_call.1} parent=0 // pred_check
    _
  $region11: #{tpu_custom_call.1} parent=0 // pred_check_branch
    %155 = sbr.rel (0) target = $region13
  $region12: #{tpu_custom_call.1} parent=0 // pred_region
    _
  $region13: #{tpu_custom_call.1} parent=0 // pred_fallthru
    _
  // Predicated region
  $region14: #{tpu_custom_call.1} parent=0 // pred_check
    _
  $region15: #{tpu_custom_call.1} parent=0 // pred_check_branch
    %157 = sbr.rel (0) target = $region17
  $region16: #{tpu_custom_call.1} parent=0 // pred_region
    _
  $region17: #{tpu_custom_call.1} parent=0 // pred_fallthru
    _

</llo_original>
